<compile_context>
chip_gen: v7x
topology: tpu7x:2x2x1
jax: 0.10.0
libtpu: 0.0.40
codegen_flags: <defaults>
</compile_context>

<pallas_src>
import functools

import jax
import jax.numpy as jnp
from jax.experimental import pallas as pl
from jax.experimental.pallas import tpu as pltpu


def _polyloss_kernel(logits_ref, targets_ref, out_ref, acc_ref, *,
                     label_smoothing, epsilon, n_total, block_n,
                     blocks_per_shard):
    s = pl.program_id(0)   # shard (TensorCore) index — "parallel" axis
    i = pl.program_id(1)   # row-block index within shard — "arbitrary" axis

    @pl.when(i == 0)
    def _init():
        acc_ref[...] = jnp.zeros_like(acc_ref)

    x = logits_ref[...].astype(jnp.float32)        # [bn, C] cast in vregs
    tgt = targets_ref[...]                         # [bn, 1] int32
    bn, c = x.shape

    # Global row index of each row in this block (unclamped, so rows belonging
    # to clamped / padded blocks are correctly detected as invalid).
    blk = s * blocks_per_shard + i
    row = jax.lax.broadcasted_iota(jnp.int32, (bn, 1), 0) + blk * block_n
    row_valid = row < n_total                      # [bn, 1] bool
    # Sanitize BEFORE max/exp so garbage rows can never create inf/NaN.
    x = jnp.where(row_valid, x, 0.0)
    valid_f = row_valid.astype(jnp.float32)

    # Numerically stable log-sum-exp over the class axis (lanes) — single exp.
    m = jnp.max(x, axis=-1, keepdims=True)         # [bn, 1]
    ez = jnp.exp(x - m)                            # [bn, C]
    ssum = jnp.sum(ez, axis=-1, keepdims=True)     # [bn, 1]
    lse = jnp.log(ssum) + m                        # [bn, 1]

    # Target logit via select on an iota compare (no f32 one-hot materialized).
    cls = jax.lax.broadcasted_iota(jnp.int32, (bn, c), 1)
    x_tgt = jnp.sum(jnp.where(cls == tgt, x, 0.0), axis=-1, keepdims=True)

    # Cross-entropy with label smoothing, without materializing log_p / q:
    #   ce_i = (1-ls)*(lse - x_tgt) + (ls/C)*(C*lse - sum(x))
    ls = float(label_smoothing)
    ce_i = (1.0 - ls) * (lse - x_tgt)              # [bn, 1]
    if ls != 0.0:                                  # compile-time branch
        sum_x = jnp.sum(x, axis=-1, keepdims=True)
        ce_i = ce_i + (ls / c) * (jnp.float32(c) * lse - sum_x)

    # pt_i = softmax prob of the target class — exact, tiny EUP exp on [bn,1].
    pt_i = jnp.exp(x_tgt - lse)                    # [bn, 1]

    # Cheap per-step VPU vector add; cross-sublane reduce deferred to finalize.
    acc_ref[...] += (ce_i - jnp.float32(epsilon) * pt_i) * valid_f

    @pl.when(i == pl.num_programs(1) - 1)
    def _finalize():
        out_ref[0, 0] = jnp.sum(acc_ref[...])


def _vmem_capacity_bytes():
    """Physical per-TensorCore VMEM; conservative 64 MiB fallback (v7x)."""
    try:
        cap = int(pltpu.get_tpu_info().vmem_capacity_bytes)
        if cap > 0:
            return cap
    except Exception:
        pass
    return 64 * 1024 * 1024


def _choose_block_n(n, c, itemsize, budget_bytes):
    """Row-block size from a VMEM byte budget.

    Per-row working set ~= double-buffered native-dtype input row plus ~6 f32
    full-width temporaries (x, ez, iota, selects, ...).  Also targets a few
    MiB of native logits per block so DMAs are deep and grid overhead is
    amortized (no artificial row ceiling)."""
    per_row = 2 * c * itemsize + 6 * c * 4 + 32
    bn_vmem = budget_bytes // max(1, per_row)
    bn_target = (4 * 1024 * 1024) // max(1, c * itemsize)   # ~4 MiB native
    bn = max(8, min(bn_vmem, bn_target))
    bn -= bn % 8
    bn = max(8, bn)
    n_pad8 = ((n + 7) // 8) * 8
    return min(bn, max(8, n_pad8))


def poly_loss(outputs, targets, *, label_smoothing=0.0, epsilon=2.0,
              block_n=None):
    """outputs: [N, C] float (any dtype, e.g. bf16); targets: [N] int class
    indices. Returns scalar f32 PolyLoss.

    Note: out-of-range targets (t < 0 or t >= C) silently give pt_i = 0 and
    x_tgt = 0 instead of raising like PyTorch's cross_entropy."""
    n, c = outputs.shape
    itemsize = jnp.dtype(outputs.dtype).itemsize
    targets_2d = targets.astype(jnp.int32).reshape(n, 1)

    # Generation-aware VMEM budget: ~45 MiB scoped on v7x (64 MiB physical),
    # up to ~90 MiB on v5e/v6e (128 MiB physical). Block budget capped at
    # 40 MiB so the working set always fits v7x even if the query falls back.
    vmem_cap = _vmem_capacity_bytes()
    vmem_limit = max(32 * 1024 * 1024, min(int(vmem_cap * 0.70), 96 * 1024 * 1024))
    block_budget = min(int(vmem_limit * 0.85), 40 * 1024 * 1024)

    if block_n is None:
        block_n = _choose_block_n(n, c, itemsize, block_budget)

    nb_total = pl.cdiv(n, block_n)
    num_shards = 2 if nb_total >= 2 else 1        # 2 TCs on v7x; free elsewhere
    bps = pl.cdiv(nb_total, num_shards)

    # Clamp so shard 1's padded trailing block re-reads a valid block; its
    # rows are masked out inside the kernel (row >= N).
    def data_map(s, i):
        return (jnp.minimum(s * bps + i, nb_total - 1), 0)

    kernel = functools.partial(
        _polyloss_kernel,
        label_smoothing=float(label_smoothing),
        epsilon=float(epsilon),
        n_total=n,
        block_n=block_n,
        blocks_per_shard=bps,
    )

    cost = pl.CostEstimate(
        flops=8 * n * c,
        transcendentals=n * c + 2 * n,
        bytes_accessed=n * c * itemsize + n * 4 + num_shards * 4,
    )

    partials = pl.pallas_call(
        kernel,
        out_shape=jax.ShapeDtypeStruct((num_shards, 1), jnp.float32),
        grid_spec=pltpu.PrefetchScalarGridSpec(
            num_scalar_prefetch=0,
            grid=(num_shards, bps),
            in_specs=[
                # logits stay in native dtype in HBM; cast to f32 in-kernel
                pl.BlockSpec((block_n, c), data_map),
                pl.BlockSpec((block_n, 1), data_map),
            ],
            out_specs=pl.BlockSpec((1, 1), lambda s, i: (s, 0),
                                   memory_space=pltpu.MemorySpace.SMEM),
            scratch_shapes=[pltpu.VMEM((block_n, 1), jnp.float32)],
        ),
        compiler_params=pltpu.CompilerParams(
            dimension_semantics=("parallel", "arbitrary"),
            vmem_limit_bytes=vmem_limit,
        ),
        cost_estimate=cost,
    )(outputs, targets_2d)

    # loss = (sum_i (ce_i - eps*pt_i)) / N + eps
    return jnp.sum(partials) / jnp.float32(n) + jnp.float32(epsilon)


def _poly_loss_ref(outputs, targets, *, label_smoothing=0.0, epsilon=2.0):
    """Pure-JAX reference mirroring the PyTorch module (weight=None)."""
    n, c = outputs.shape
    log_p = jax.nn.log_softmax(outputs.astype(jnp.float32), axis=1)
    onehot = jax.nn.one_hot(targets, c, dtype=jnp.float32)
    q = (1.0 - label_smoothing) * onehot + label_smoothing / c
    ce = jnp.mean(-jnp.sum(q * log_p, axis=1))
    pt = jnp.sum(onehot * jnp.exp(log_p), axis=1)
    return jnp.mean(ce + epsilon * (1.0 - pt))


if __name__ == "__main__":
    key = jax.random.PRNGKey(0)

    # Case 1: f32 logits, no label smoothing (module defaults), auto block_n.
    k1, k2 = jax.random.split(key)
    N1, C1 = 64, 16
    out1 = jax.random.normal(k1, (N1, C1), dtype=jnp.float32)
    tgt1 = jax.random.randint(k2, (N1,), 0, C1, dtype=jnp.int32)
    got1 = poly_loss(out1, tgt1, label_smoothing=0.0, epsilon=2.0)
    jax.block_until_ready(got1)
    ref1 = _poly_loss_ref(out1, tgt1, label_smoothing=0.0, epsilon=2.0)
    assert jnp.allclose(got1, ref1, rtol=5e-3, atol=5e-3), (got1, ref1)

    # Case 2: N not a multiple of block_n + label smoothing -> exercises the
    # 2-shard grid, clamped padded block, VMEM accumulator and row masking.
    k3, k4 = jax.random.split(k1)
    N2, C2 = 21, 16
    out2 = jax.random.normal(k3, (N2, C2), dtype=jnp.float32)
    tgt2 = jax.random.randint(k4, (N2,), 0, C2, dtype=jnp.int32)
    got2 = poly_loss(out2, tgt2, label_smoothing=0.1, epsilon=1.0, block_n=8)
    jax.block_until_ready(got2)
    ref2 = _poly_loss_ref(out2, tgt2, label_smoothing=0.1, epsilon=1.0)
    assert jnp.allclose(got2, ref2, rtol=5e-3, atol=5e-3), (got2, ref2)

    # Case 3: bf16 logits stay bf16 in HBM (cast to f32 in-kernel).
    k5, k6 = jax.random.split(k2)
    N3, C3 = 16, 16
    out3 = jax.random.normal(k5, (N3, C3), dtype=jnp.float32).astype(jnp.bfloat16)
    tgt3 = jax.random.randint(k6, (N3,), 0, C3, dtype=jnp.int32)
    got3 = poly_loss(out3, tgt3, label_smoothing=0.0, epsilon=2.0)
    jax.block_until_ready(got3)
    ref3 = _poly_loss_ref(out3, tgt3, label_smoothing=0.0, epsilon=2.0)
    assert jnp.allclose(got3, ref3, rtol=5e-3, atol=5e-3), (got3, ref3)

    print("KERNEL_OK")
</pallas_src>

<mosaic_0001>
module attributes {stable_mosaic.version = 11 : i64} {
  func.func @_polyloss_kernel(%arg0: i32, %arg1: i32, %arg2: memref<64x16xf32, #tpu.memory_space<vmem>>, %arg3: memref<64x1xi32, #tpu.memory_space<vmem>>, %arg4: memref<1x1xf32, #tpu.memory_space<smem>>, %arg5: memref<64x1xf32, #tpu.memory_space<vmem>>) attributes {dimension_semantics = [#tpu.dimension_semantics<parallel>, #tpu.dimension_semantics<arbitrary>], iteration_bounds = array<i64: 1, 1>, scalar_prefetch = 0 : i64, scratch_operands = 1 : i64, tpu.core_type = #tpu.core_type<tc>, window_params = [{transform_indices = @transform_0, window_bounds = array<i64: 64, 16>}, {transform_indices = @transform_1, window_bounds = array<i64: 64, 1>}, {transform_indices = @transform_2, window_bounds = array<i64: 1, 1>}]} {
    %c0_i32 = arith.constant 0 : i32
    %0 = arith.cmpi eq, %arg1, %c0_i32 : i32
    %1 = arith.extui %0 : i1 to i32
    %c0_i32_0 = arith.constant 0 : i32
    %2 = arith.cmpi ne, %1, %c0_i32_0 : i32
    scf.if %2 {
      %cst_17 = arith.constant 0.000000e+00 : f32
      %50 = vector.broadcast %cst_17 : f32 to vector<64x1xf32>
      %c0_18 = arith.constant 0 : index
      %c0_19 = arith.constant 0 : index
      %51 = vector.load %arg5[%c0_18, %c0_19] : memref<64x1xf32, #tpu.memory_space<vmem>>, vector<64x1xf32>
      tpu.vector_store %arg5[%c0_18, %c0_19], %50 {strides = array<i32>} : memref<64x1xf32, #tpu.memory_space<vmem>>, vector<64x1xf32>,
    } else {
    }
    %c0 = arith.constant 0 : index
    %c0_1 = arith.constant 0 : index
    %3 = vector.load %arg2[%c0, %c0_1] : memref<64x16xf32, #tpu.memory_space<vmem>>, vector<64x16xf32>
    %c0_2 = arith.constant 0 : index
    %c0_3 = arith.constant 0 : index
    %4 = vector.load %arg3[%c0_2, %c0_3] : memref<64x1xi32, #tpu.memory_space<vmem>>, vector<64x1xi32>
    %c1_i32 = arith.constant 1 : i32
    %5 = arith.muli %arg0, %c1_i32 : i32
    %6 = arith.addi %5, %arg1 : i32
    %7 = tpu.iota {dimensions = array<i32: 0>} : vector<64x1xi32>
    %c64_i32 = arith.constant 64 : i32
    %8 = arith.muli %6, %c64_i32 : i32
    %9 = vector.broadcast %8 : i32 to vector<64x1xi32>
    %10 = arith.addi %7, %9 : vector<64x1xi32>
    %c64_i32_4 = arith.constant 64 : i32
    %11 = vector.broadcast %c64_i32_4 : i32 to vector<64x1xi32>
    %12 = arith.cmpi slt, %10, %11 : vector<64x1xi32>
    %cst = arith.constant 0.000000e+00 : f32
    %13 = vector.shape_cast %12 : vector<64x1xi1> to vector<64x1xi1>
    %14 = vector.broadcast %13 : vector<64x1xi1> to vector<64x16xi1>
    %15 = vector.broadcast %cst : f32 to vector<64x16xf32>
    %16 = arith.select %14, %3, %15 : vector<64x16xi1>, vector<64x16xf32>
    %17 = arith.extui %12 : vector<64x1xi1> to vector<64x1xi32>
    %18 = arith.sitofp %17 : vector<64x1xi32> to vector<64x1xf32>
    %cst_5 = arith.constant dense<0xFF800000> : vector<64xf32>
    %19 = vector.multi_reduction <maximumf>, %16, %cst_5 [1] : vector<64x16xf32> to vector<64xf32>
    %20 = vector.shape_cast %19 : vector<64xf32> to vector<64x1xf32>
    %21 = vector.broadcast %20 : vector<64x1xf32> to vector<64x16xf32>
    %22 = arith.subf %16, %21 : vector<64x16xf32>
    %23 = math.exp %22 : vector<64x16xf32>
    %cst_6 = arith.constant dense<0.000000e+00> : vector<64xf32>
    %24 = vector.multi_reduction <add>, %23, %cst_6 [1] : vector<64x16xf32> to vector<64xf32>
    %25 = vector.shape_cast %24 : vector<64xf32> to vector<64x1xf32>
    %26 = math.log %25 : vector<64x1xf32>
    %27 = arith.addf %26, %20 : vector<64x1xf32>
    %28 = tpu.iota {dimensions = array<i32: 1>} : vector<64x16xi32>
    %29 = vector.broadcast %4 : vector<64x1xi32> to vector<64x16xi32>
    %30 = arith.cmpi eq, %28, %29 : vector<64x16xi32>
    %cst_7 = arith.constant 0.000000e+00 : f32
    %31 = vector.broadcast %cst_7 : f32 to vector<64x16xf32>
    %32 = arith.select %30, %16, %31 : vector<64x16xi1>, vector<64x16xf32>
    %cst_8 = arith.constant dense<0.000000e+00> : vector<64xf32>
    %33 = vector.multi_reduction <add>, %32, %cst_8 [1] : vector<64x16xf32> to vector<64xf32>
    %34 = vector.shape_cast %33 : vector<64xf32> to vector<64x1xf32>
    %35 = arith.subf %27, %34 : vector<64x1xf32>
    %cst_9 = arith.constant 1.000000e+00 : f32
    %36 = vector.broadcast %cst_9 : f32 to vector<64x1xf32>
    %37 = arith.mulf %36, %35 : vector<64x1xf32>
    %38 = arith.subf %34, %27 : vector<64x1xf32>
    %39 = math.exp %38 : vector<64x1xf32>
    %c0_10 = arith.constant 0 : index
    %c0_11 = arith.constant 0 : index
    %40 = vector.load %arg5[%c0_10, %c0_11] : memref<64x1xf32, #tpu.memory_space<vmem>>, vector<64x1xf32>
    %cst_12 = arith.constant 2.000000e+00 : f32
    %41 = vector.broadcast %cst_12 : f32 to vector<64x1xf32>
    %42 = arith.mulf %41, %39 : vector<64x1xf32>
    %43 = arith.subf %37, %42 : vector<64x1xf32>
    %44 = arith.mulf %43, %18 : vector<64x1xf32>
    %45 = arith.addf %40, %44 : vector<64x1xf32>
    %c0_13 = arith.constant 0 : index
    %c0_14 = arith.constant 0 : index
    %46 = vector.load %arg5[%c0_13, %c0_14] : memref<64x1xf32, #tpu.memory_space<vmem>>, vector<64x1xf32>
    tpu.vector_store %arg5[%c0_13, %c0_14], %45 {strides = array<i32>} : memref<64x1xf32, #tpu.memory_space<vmem>>, vector<64x1xf32>,
    %c0_i32_15 = arith.constant 0 : i32
    %47 = arith.cmpi eq, %arg1, %c0_i32_15 : i32
    %48 = arith.extui %47 : i1 to i32
    %c0_i32_16 = arith.constant 0 : i32
    %49 = arith.cmpi ne, %48, %c0_i32_16 : i32
    scf.if %49 {
      %c0_17 = arith.constant 0 : index
      %c0_18 = arith.constant 0 : index
      %50 = vector.load %arg5[%c0_17, %c0_18] : memref<64x1xf32, #tpu.memory_space<vmem>>, vector<64x1xf32>
      %51 = vector.shape_cast %50 : vector<64x1xf32> to vector<1x64x1xf32>
      %cst_19 = arith.constant dense<0.000000e+00> : vector<1xf32>
      %52 = vector.multi_reduction <add>, %51, %cst_19 [1, 2] : vector<1x64x1xf32> to vector<1xf32>
      %53 = vector.shape_cast %52 : vector<1xf32> to vector<1x1x1xf32>
      %54 = vector.extract %53[0, 0, 0] : f32 from vector<1x1x1xf32>
      %c0_20 = arith.constant 0 : index
      %c0_21 = arith.constant 0 : index
      %55 = memref.load %arg4[%c0_20, %c0_21] : memref<1x1xf32, #tpu.memory_space<smem>>
      memref.store %54, %arg4[%c0_20, %c0_21] : memref<1x1xf32, #tpu.memory_space<smem>>
    } else {
    }
    return
  }
  func.func @transform_0(%arg0: i32, %arg1: i32) -> (i32, i32) {
    %c1_i32 = arith.constant 1 : i32
    %0 = arith.muli %arg0, %c1_i32 : i32
    %1 = arith.addi %0, %arg1 : i32
    %c0_i32 = arith.constant 0 : i32
    %2 = arith.minsi %1, %c0_i32 : i32
    %c0_i32_0 = arith.constant 0 : i32
    %c0_i32_1 = arith.constant 0 : i32
    return %2, %c0_i32_0 : i32, i32
  }
  func.func @transform_1(%arg0: i32, %arg1: i32) -> (i32, i32) {
    %c1_i32 = arith.constant 1 : i32
    %0 = arith.muli %arg0, %c1_i32 : i32
    %1 = arith.addi %0, %arg1 : i32
    %c0_i32 = arith.constant 0 : i32
    %2 = arith.minsi %1, %c0_i32 : i32
    %c0_i32_0 = arith.constant 0 : i32
    %c0_i32_1 = arith.constant 0 : i32
    return %2, %c0_i32_0 : i32, i32
  }
  func.func @transform_2(%arg0: i32, %arg1: i32) -> (i32, i32) {
    %c0_i32 = arith.constant 0 : i32
    %c0_i32_0 = arith.constant 0 : i32
    return %arg0, %c0_i32 : i32, i32
  }
}

</mosaic_0001>

<llo_original>
// kernel: tpu_custom_call.1
$region0: #{tpu_custom_call.1}
  #allocation0 [shape = 'u32[]', space=smem, size = 0x4, offset = 0x4, fixed_abs, tag = 'smem constant byte address 0x4 - core index']
  #allocation1 [shape = 'u32[144,128]{1,0:T(1,128)}', space=vmem, size = 0x12000, scoped, tag = 'internal scratch']
  #allocation2 [shape = 'f32[64,1]{1,0:T(8,128)}', space=vmem, size = 0x8000, scoped, tag = 'scratch operand']
  %s0 = inlined_call_operand.vmem [shape: f32[64,16], index: 0, kind: input, shape index: {}]
  %s1 = inlined_call_operand.vmem [shape: s32[64,1], index: 1, kind: input, shape index: {}]
  %s2 = inlined_call_operand.hbm [shape: f32[1,1], index: 2, kind: output, shape index: {}]
  %s3 = sld [smem:[#allocation0]]
  $region26: #{tpu_custom_call.1} parent=0
    _
  %s5 = ssub.s32 1, %s3
  %s6 = scalar_select 0, %s5, %s3
  $region1: #{tpu_custom_call.1} parent=0
    #allocation3 [shape = 'u8[512]{0}', space=smem, size = 0x200, scoped, tag = 'output window, operand 0, single buffered']
    #allocation4 [shape = 's32[1]{0}', space=sflag, size = 0x4, scoped, tag = 'scoped memory for tpu_custom_call.1']
    %7 = vsyncpa [#allocation4], 0
    // Predicated region
    $region2: #{tpu_custom_call.1} parent=1 // pred_check
      _
    $region3: #{tpu_custom_call.1} parent=1 // pred_check_branch
      %9 = sbr.rel (0) target = $region5
    $region4: #{tpu_custom_call.1} parent=1 // pred_region
      %s10 = sadd.s32 0, 0
      %p11 = scmp.lt.s32.totalorder %s10, 0
      %s12 = scalar_select %p11, %s10, 0
      %s13 = smul.u32 8, %s12
      %p14 = scmp.lt.s32.totalorder %s13, 7
      %s15 = scalar_select %p14, %s13, 7
      %s16 = smul.addr %s15, 8
      %s17 = scalar_lea.vmem %s0, %s16
      %s18 = sadd.s32 0, 0
      %p19 = scmp.lt.s32.totalorder %s18, 0
      %s20 = scalar_select %p19, %s18, 0
      %s21 = smul.u32 8, %s20
    $region5: #{tpu_custom_call.1} parent=1 // pred_fallthru
      _
    // Predicated region
    $region6: #{tpu_custom_call.1} parent=1 // pred_check
      _
    $region7: #{tpu_custom_call.1} parent=1 // pred_check_branch
      %23 = sbr.rel (0) target = $region9
    $region8: #{tpu_custom_call.1} parent=1 // pred_region
      %s24 = sadd.s32 0, 0
      %p25 = scmp.lt.s32.totalorder %s24, 0
      %s26 = scalar_select %p25, %s24, 0
      %s27 = smul.u32 8, %s26
      %p28 = scmp.lt.s32.totalorder %s27, 7
      %s29 = scalar_select %p28, %s27, 7
      %s30 = smul.addr %s29, 8
      %s31 = scalar_lea.vmem %s1, %s30
      %s32 = sadd.s32 0, 0
      %p33 = scmp.lt.s32.totalorder %s32, 0
      %s34 = scalar_select %p33, %s32, 0
      %s35 = smul.u32 8, %s34
    $region9: #{tpu_custom_call.1} parent=1 // pred_fallthru
      _
    %s36 = sadd.s32 0, 0
    %p37 = scmp.lt.s32.totalorder %s36, 0
    %s38 = scalar_select %p37, %s36, 0
    %s39 = smul.u32 8, %s38
    %p40 = scmp.lt.s32.totalorder %s39, 7
    %s41 = scalar_select %p40, %s39, 7
    %s42 = smul.addr %s41, 8
    %s43 = scalar_lea.vmem %s0, %s42
    %s44 = sadd.s32 0, 0
    %p45 = scmp.lt.s32.totalorder %s44, 0
    %s46 = scalar_select %p45, %s44, 0
    %s47 = smul.u32 8, %s46
    %p48 = scmp.lt.s32.totalorder %s47, 7
    %s49 = scalar_select %p48, %s47, 7
    %s50 = smul.addr %s49, 8
    %s51 = scalar_lea.vmem %s1, %s50
    %s52 = sadd.s32 0, 0
    %p53 = scmp.lt.s32.totalorder %s52, 0
    %s54 = scalar_select %p53, %s52, 0
    %s55 = smul.u32 8, %s54
    %p56 = scmp.lt.s32.totalorder %s55, 7
    %s57 = scalar_select %p56, %s55, 7
    %s58 = smul.addr %s57, 8
    %s59 = scalar_lea.vmem %s0, %s58
    %s60 = sadd.s32 0, 0
    %p61 = scmp.lt.s32.totalorder %s60, 0
    %s62 = scalar_select %p61, %s60, 0
    %s63 = smul.u32 8, %s62
    %s64 = sadd.s32 0, 0
    %p65 = scmp.lt.s32.totalorder %s64, 0
    %s66 = scalar_select %p65, %s64, 0
    %s67 = smul.u32 8, %s66
    %p68 = scmp.lt.s32.totalorder %s67, 7
    %s69 = scalar_select %p68, %s67, 7
    %s70 = smul.addr %s69, 8
    %s71 = scalar_lea.vmem %s1, %s70
    %s72 = sadd.s32 0, 0
    %p73 = scmp.lt.s32.totalorder %s72, 0
    %s74 = scalar_select %p73, %s72, 0
    %s75 = smul.u32 8, %s74
    %p76 = scmp.eq.s32.totalorder 0, 0
    // Predicated region
    $region10: #{tpu_custom_call.1} parent=1 // pred_check
      %p77 = pneg %p76
    $region11: #{tpu_custom_call.1} parent=1 // pred_check_branch
      %79 = sbr.rel (%p77) target = $region13
    $region12: #{tpu_custom_call.1} parent=1 // pred_region
      %vm80 = vcmask 7168
      %81 = vst.msk [vmem:[#allocation2] sm:$0xff] %vm80, 0.0
      %82 = vst.msk [vmem:[#allocation2 + $0x8] sm:$0xff] %vm80, 0.0
      %83 = vst.msk [vmem:[#allocation2 + $0x10] sm:$0xff] %vm80, 0.0
      %84 = vst.msk [vmem:[#allocation2 + $0x18] sm:$0xff] %vm80, 0.0
      %85 = vst.msk [vmem:[#allocation2 + $0x20] sm:$0xff] %vm80, 0.0
      %86 = vst.msk [vmem:[#allocation2 + $0x28] sm:$0xff] %vm80, 0.0
      %87 = vst.msk [vmem:[#allocation2 + $0x30] sm:$0xff] %vm80, 0.0
      %88 = vst.msk [vmem:[#allocation2 + $0x38] sm:$0xff] %vm80, 0.0
    $region13: #{tpu_custom_call.1} parent=1 // pred_fallthru
      _
    %v89 = vld [vmem:[%s59] sm:$0xff]
    %v90 = vld [vmem:[%s59 + $0x8] sm:$0xff]
    %v91 = vld [vmem:[%s59 + $0x10] sm:$0xff]
    %v92 = vld [vmem:[%s59 + $0x18] sm:$0xff]
    %v93 = vld [vmem:[%s59 + $0x20] sm:$0xff]
    %v94 = vld [vmem:[%s59 + $0x28] sm:$0xff]
    %v95 = vld [vmem:[%s59 + $0x30] sm:$0xff]
    %v96 = vld [vmem:[%s59 + $0x38] sm:$0xff]
    %v97 = vld [vmem:[%s71] sm:$0xff]
    %v98 = vld [vmem:[%s71 + $0x8] sm:$0xff]
    %v99 = vld [vmem:[%s71 + $0x10] sm:$0xff]
    %v100 = vld [vmem:[%s71 + $0x18] sm:$0xff]
    %v101 = vld [vmem:[%s71 + $0x20] sm:$0xff]
    %v102 = vld [vmem:[%s71 + $0x28] sm:$0xff]
    %v103 = vld [vmem:[%s71 + $0x30] sm:$0xff]
    %v104 = vld [vmem:[%s71 + $0x38] sm:$0xff]
    %s105 = sadd.s32 0, 0
    %v106 = vlaneseq
    %v107 = vshrl.u32 %v106, 7
    %v108 = vadd.s32 %v107, 8
    %v109 = vadd.s32 %v107, 16
    %v110 = vadd.s32 %v107, 24
    %v111 = vadd.s32 %v107, 32
    %v112 = vadd.s32 %v107, 40
    %v113 = vadd.s32 %v107, 48
    %v114 = vadd.s32 %v107, 56
    %s115 = smul.u32 %s105, 64
    %v116 = vstv %s115
    %v117 = vadd.s32 %v107, %v116
    %v118 = vadd.s32 %v108, %v116
    %v119 = vadd.s32 %v109, %v116
    %v120 = vadd.s32 %v110, %v116
    %v121 = vadd.s32 %v111, %v116
    %v122 = vadd.s32 %v112, %v116
    %v123 = vadd.s32 %v113, %v116
    %v124 = vadd.s32 %v114, %v116
    %vm125 = vcmp.lt.s32.totalorder %v117, 64
    %vm126 = vcmp.lt.s32.totalorder %v118, 64
    %vm127 = vcmp.lt.s32.totalorder %v119, 64
    %vm128 = vcmp.lt.s32.totalorder %v120, 64
    %vm129 = vcmp.lt.s32.totalorder %v121, 64
    %vm130 = vcmp.lt.s32.totalorder %v122, 64
    %vm131 = vcmp.lt.s32.totalorder %v123, 64
    %vm132 = vcmp.lt.s32.totalorder %v124, 64
    %v133 = vsel %vm125, 1, 0
    %v134 = vsel %vm126, 1, 0
    %v135 = vsel %vm127, 1, 0
    %v136 = vsel %vm128, 1, 0
    %v137 = vsel %vm129, 1, 0
    %v138 = vsel %vm130, 1, 0
    %v139 = vsel %vm131, 1, 0
    %v140 = vsel %vm132, 1, 0
    %vm141 = vcmp.eq.s32.totalorder %v133, 1
    %vm142 = vcmp.eq.s32.totalorder %v134, 1
    %vm143 = vcmp.eq.s32.totalorder %v135, 1
    %vm144 = vcmp.eq.s32.totalorder %v136, 1
    %vm145 = vcmp.eq.s32.totalorder %v137, 1
    %vm146 = vcmp.eq.s32.totalorder %v138, 1
    %vm147 = vcmp.eq.s32.totalorder %v139, 1
    %vm148 = vcmp.eq.s32.totalorder %v140, 1
    %v149 = vsel %vm141, %v89, 0.0
    %v150 = vsel %vm142, %v90, 0.0
    %v151 = vsel %vm143, %v91, 0.0
    %v152 = vsel %vm144, %v92, 0.0
    %v153 = vsel %vm145, %v93, 0.0
    %v154 = vsel %vm146, %v94, 0.0
    %v155 = vsel %vm147, %v95, 0.0
    %v156 = vsel %vm148, %v96, 0.0
    %v157 = vcvt.s32.f32 %v133
    %v158 = vcvt.s32.f32 %v134
    %v159 = vcvt.s32.f32 %v135
    %v160 = vcvt.s32.f32 %v136
    %v161 = vcvt.s32.f32 %v137
    %v162 = vcvt.s32.f32 %v138
    %v163 = vcvt.s32.f32 %v139
    %v164 = vcvt.s32.f32 %v140
    %vm165 = vcmask 130048
    %v166 = vsel %vm165, %v149, -inf
    %167 = vmax.xlane.f32.xlu0 %v166
    %v168 = vpop.xlane.xlu0 %167
    %v169 = vsel %vm165, %v150, -inf
    %170 = vmax.xlane.f32.xlu0 %v169
    %v171 = vpop.xlane.xlu0 %170
    %v172 = vsel %vm165, %v151, -inf
    %173 = vmax.xlane.f32.xlu0 %v172
    %v174 = vpop.xlane.xlu0 %173
    %v175 = vsel %vm165, %v152, -inf
    %176 = vmax.xlane.f32.xlu0 %v175
    %v177 = vpop.xlane.xlu0 %176
    %v178 = vsel %vm165, %v153, -inf
    %179 = vmax.xlane.f32.xlu0 %v178
    %v180 = vpop.xlane.xlu0 %179
    %v181 = vsel %vm165, %v154, -inf
    %182 = vmax.xlane.f32.xlu0 %v181
    %v183 = vpop.xlane.xlu0 %182
    %v184 = vsel %vm165, %v155, -inf
    %185 = vmax.xlane.f32.xlu0 %v184
    %v186 = vpop.xlane.xlu0 %185
    %v187 = vsel %vm165, %v156, -inf
    %188 = vmax.xlane.f32.xlu0 %v187
    %v189 = vpop.xlane.xlu0 %188
    %v190 = vsub.f32 %v149, %v168
    %v191 = vsub.f32 %v150, %v171
    %v192 = vsub.f32 %v151, %v174
    %v193 = vsub.f32 %v152, %v177
    %v194 = vsub.f32 %v153, %v180
    %v195 = vsub.f32 %v154, %v183
    %v196 = vsub.f32 %v155, %v186
    %v197 = vsub.f32 %v156, %v189
    %v198 = vmul.f32 %v190, 1.442695
    %v199 = vpow.pop %v198
    %v200 = vmul.f32 %v191, 1.442695
    %v201 = vpow.pop %v200
    %v202 = vmul.f32 %v192, 1.442695
    %v203 = vpow.pop %v202
    %v204 = vmul.f32 %v193, 1.442695
    %v205 = vpow.pop %v204
    %v206 = vmul.f32 %v194, 1.442695
    %v207 = vpow.pop %v206
    %v208 = vmul.f32 %v195, 1.442695
    %v209 = vpow.pop %v208
    %v210 = vmul.f32 %v196, 1.442695
    %v211 = vpow.pop %v210
    %v212 = vmul.f32 %v197, 1.442695
    %v213 = vpow.pop %v212
    %v214 = vsel %vm165, %v199, 0.0
    %215 = vadd.xlane.f32.xlu0 %v214
    %v216 = vpop.xlane.xlu0 %215
    %v217 = vsel %vm165, %v201, 0.0
    %218 = vadd.xlane.f32.xlu0 %v217
    %v219 = vpop.xlane.xlu0 %218
    %v220 = vsel %vm165, %v203, 0.0
    %221 = vadd.xlane.f32.xlu0 %v220
    %v222 = vpop.xlane.xlu0 %221
    %v223 = vsel %vm165, %v205, 0.0
    %224 = vadd.xlane.f32.xlu0 %v223
    %v225 = vpop.xlane.xlu0 %224
    %v226 = vsel %vm165, %v207, 0.0
    %227 = vadd.xlane.f32.xlu0 %v226
    %v228 = vpop.xlane.xlu0 %227
    %v229 = vsel %vm165, %v209, 0.0
    %230 = vadd.xlane.f32.xlu0 %v229
    %v231 = vpop.xlane.xlu0 %230
    %v232 = vsel %vm165, %v211, 0.0
    %233 = vadd.xlane.f32.xlu0 %v232
    %v234 = vpop.xlane.xlu0 %233
    %v235 = vsel %vm165, %v213, 0.0
    %236 = vadd.xlane.f32.xlu0 %v235
    %v237 = vpop.xlane.xlu0 %236
    %v238 = vlog2.pop %v216
    %v239 = vmul.f32 %v238, 0.6931472
    %v240 = vlog2.pop %v219
    %v241 = vmul.f32 %v240, 0.6931472
    %v242 = vlog2.pop %v222
    %v243 = vmul.f32 %v242, 0.6931472
    %v244 = vlog2.pop %v225
    %v245 = vmul.f32 %v244, 0.6931472
    %v246 = vlog2.pop %v228
    %v247 = vmul.f32 %v246, 0.6931472
    %v248 = vlog2.pop %v231
    %v249 = vmul.f32 %v248, 0.6931472
    %v250 = vlog2.pop %v234
    %v251 = vmul.f32 %v250, 0.6931472
    %v252 = vlog2.pop %v237
    %v253 = vmul.f32 %v252, 0.6931472
    %v254 = vadd.f32 %v239, %v168
    %v255 = vadd.f32 %v241, %v171
    %v256 = vadd.f32 %v243, %v174
    %v257 = vadd.f32 %v245, %v177
    %v258 = vadd.f32 %v247, %v180
    %v259 = vadd.f32 %v249, %v183
    %v260 = vadd.f32 %v251, %v186
    %v261 = vadd.f32 %v253, %v189
    %v262 = vlaneseq
    %v263 = vand.u32 %v262, 127
    %264 = vset.pattern.permute.xlu0 0
    %265 = vperm.xlu0 %264, %v97
    %v266 = vpop.permute.xlu0 %265
    %267 = vset.pattern.permute.xlu0 0
    %268 = vperm.xlu0 %267, %v98
    %v269 = vpop.permute.xlu0 %268
    %270 = vset.pattern.permute.xlu0 0
    %271 = vperm.xlu0 %270, %v99
    %v272 = vpop.permute.xlu0 %271
    %273 = vset.pattern.permute.xlu0 0
    %274 = vperm.xlu0 %273, %v100
    %v275 = vpop.permute.xlu0 %274
    %276 = vset.pattern.permute.xlu0 0
    %277 = vperm.xlu0 %276, %v101
    %v278 = vpop.permute.xlu0 %277
    %279 = vset.pattern.permute.xlu0 0
    %280 = vperm.xlu0 %279, %v102
    %v281 = vpop.permute.xlu0 %280
    %282 = vset.pattern.permute.xlu0 0
    %283 = vperm.xlu0 %282, %v103
    %v284 = vpop.permute.xlu0 %283
    %285 = vset.pattern.permute.xlu0 0
    %286 = vperm.xlu0 %285, %v104
    %v287 = vpop.permute.xlu0 %286
    %vm288 = vcmp.eq.s32.totalorder %v263, %v266
    %vm289 = vcmp.eq.s32.totalorder %v263, %v269
    %vm290 = vcmp.eq.s32.totalorder %v263, %v272
    %vm291 = vcmp.eq.s32.totalorder %v263, %v275
    %vm292 = vcmp.eq.s32.totalorder %v263, %v278
    %vm293 = vcmp.eq.s32.totalorder %v263, %v281
    %vm294 = vcmp.eq.s32.totalorder %v263, %v284
    %vm295 = vcmp.eq.s32.totalorder %v263, %v287
    %v296 = vsel %vm288, %v149, 0.0
    %v297 = vsel %vm289, %v150, 0.0
    %v298 = vsel %vm290, %v151, 0.0
    %v299 = vsel %vm291, %v152, 0.0
    %v300 = vsel %vm292, %v153, 0.0
    %v301 = vsel %vm293, %v154, 0.0
    %v302 = vsel %vm294, %v155, 0.0
    %v303 = vsel %vm295, %v156, 0.0
    %v304 = vsel %vm165, %v296, 0.0
    %305 = vadd.xlane.f32.xlu0 %v304
    %v306 = vpop.xlane.xlu0 %305
    %v307 = vsel %vm165, %v297, 0.0
    %308 = vadd.xlane.f32.xlu0 %v307
    %v309 = vpop.xlane.xlu0 %308
    %v310 = vsel %vm165, %v298, 0.0
    %311 = vadd.xlane.f32.xlu0 %v310
    %v312 = vpop.xlane.xlu0 %311
    %v313 = vsel %vm165, %v299, 0.0
    %314 = vadd.xlane.f32.xlu0 %v313
    %v315 = vpop.xlane.xlu0 %314
    %v316 = vsel %vm165, %v300, 0.0
    %317 = vadd.xlane.f32.xlu0 %v316
    %v318 = vpop.xlane.xlu0 %317
    %v319 = vsel %vm165, %v301, 0.0
    %320 = vadd.xlane.f32.xlu0 %v319
    %v321 = vpop.xlane.xlu0 %320
    %v322 = vsel %vm165, %v302, 0.0
    %323 = vadd.xlane.f32.xlu0 %v322
    %v324 = vpop.xlane.xlu0 %323
    %v325 = vsel %vm165, %v303, 0.0
    %326 = vadd.xlane.f32.xlu0 %v325
    %v327 = vpop.xlane.xlu0 %326
    %v328 = vsub.f32 %v254, %v306
    %v329 = vsub.f32 %v255, %v309
    %v330 = vsub.f32 %v256, %v312
    %v331 = vsub.f32 %v257, %v315
    %v332 = vsub.f32 %v258, %v318
    %v333 = vsub.f32 %v259, %v321
    %v334 = vsub.f32 %v260, %v324
    %v335 = vsub.f32 %v261, %v327
    %v336 = vsub.f32 %v306, %v254
    %v337 = vsub.f32 %v309, %v255
    %v338 = vsub.f32 %v312, %v256
    %v339 = vsub.f32 %v315, %v257
    %v340 = vsub.f32 %v318, %v258
    %v341 = vsub.f32 %v321, %v259
    %v342 = vsub.f32 %v324, %v260
    %v343 = vsub.f32 %v327, %v261
    %v344 = vmul.f32 %v336, 1.442695
    %v345 = vpow.pop %v344
    %v346 = vmul.f32 %v337, 1.442695
    %v347 = vpow.pop %v346
    %v348 = vmul.f32 %v338, 1.442695
    %v349 = vpow.pop %v348
    %v350 = vmul.f32 %v339, 1.442695
    %v351 = vpow.pop %v350
    %v352 = vmul.f32 %v340, 1.442695
    %v353 = vpow.pop %v352
    %v354 = vmul.f32 %v341, 1.442695
    %v355 = vpow.pop %v354
    %v356 = vmul.f32 %v342, 1.442695
    %v357 = vpow.pop %v356
    %v358 = vmul.f32 %v343, 1.442695
    %v359 = vpow.pop %v358
    %v360 = vld [vmem:[#allocation2] sm:$0xff]
    %v361 = vld [vmem:[#allocation2 + $0x8] sm:$0xff]
    %v362 = vld [vmem:[#allocation2 + $0x10] sm:$0xff]
    %v363 = vld [vmem:[#allocation2 + $0x18] sm:$0xff]
    %v364 = vld [vmem:[#allocation2 + $0x20] sm:$0xff]
    %v365 = vld [vmem:[#allocation2 + $0x28] sm:$0xff]
    %v366 = vld [vmem:[#allocation2 + $0x30] sm:$0xff]
    %v367 = vld [vmem:[#allocation2 + $0x38] sm:$0xff]
    %v368 = vmul.f32 %v345, 2.0
    %v369 = vmul.f32 %v347, 2.0
    %v370 = vmul.f32 %v349, 2.0
    %v371 = vmul.f32 %v351, 2.0
    %v372 = vmul.f32 %v353, 2.0
    %v373 = vmul.f32 %v355, 2.0
    %v374 = vmul.f32 %v357, 2.0
    %v375 = vmul.f32 %v359, 2.0
    %v376 = vsub.f32 %v328, %v368
    %v377 = vsub.f32 %v329, %v369
    %v378 = vsub.f32 %v330, %v370
    %v379 = vsub.f32 %v331, %v371
    %v380 = vsub.f32 %v332, %v372
    %v381 = vsub.f32 %v333, %v373
    %v382 = vsub.f32 %v334, %v374
    %v383 = vsub.f32 %v335, %v375
    %v384 = vmul.f32 %v376, %v157
    %v385 = vmul.f32 %v377, %v158
    %v386 = vmul.f32 %v378, %v159
    %v387 = vmul.f32 %v379, %v160
    %v388 = vmul.f32 %v380, %v161
    %v389 = vmul.f32 %v381, %v162
    %v390 = vmul.f32 %v382, %v163
    %v391 = vmul.f32 %v383, %v164
    %v392 = vadd.f32 %v360, %v384
    %v393 = vadd.f32 %v361, %v385
    %v394 = vadd.f32 %v362, %v386
    %v395 = vadd.f32 %v363, %v387
    %v396 = vadd.f32 %v364, %v388
    %v397 = vadd.f32 %v365, %v389
    %v398 = vadd.f32 %v366, %v390
    %v399 = vadd.f32 %v367, %v391
    %vm400 = vcmask 7168
    %401 = vst.msk [vmem:[#allocation2] sm:$0xff] %vm400, %v392
    %402 = vst.msk [vmem:[#allocation2 + $0x8] sm:$0xff] %vm400, %v393
    %403 = vst.msk [vmem:[#allocation2 + $0x10] sm:$0xff] %vm400, %v394
    %404 = vst.msk [vmem:[#allocation2 + $0x18] sm:$0xff] %vm400, %v395
    %405 = vst.msk [vmem:[#allocation2 + $0x20] sm:$0xff] %vm400, %v396
    %406 = vst.msk [vmem:[#allocation2 + $0x28] sm:$0xff] %vm400, %v397
    %407 = vst.msk [vmem:[#allocation2 + $0x30] sm:$0xff] %vm400, %v398
    %408 = vst.msk [vmem:[#allocation2 + $0x38] sm:$0xff] %vm400, %v399
    // Predicated region
    $region14: #{tpu_custom_call.1} parent=1 // pred_check
      %p409 = pneg %p76
    $region15: #{tpu_custom_call.1} parent=1 // pred_check_branch
      %411 = sbr.rel (%p409) target = $region17
    $region16: #{tpu_custom_call.1} parent=1 // pred_region
      %v412 = vld [vmem:[#allocation2] sm:$0xff]
      %v413 = vld [vmem:[#allocation2 + $0x8] sm:$0xff]
      %v414 = vld [vmem:[#allocation2 + $0x10] sm:$0xff]
      %v415 = vld [vmem:[#allocation2 + $0x18] sm:$0xff]
      %v416 = vld [vmem:[#allocation2 + $0x20] sm:$0xff]
      %v417 = vld [vmem:[#allocation2 + $0x28] sm:$0xff]
      %v418 = vld [vmem:[#allocation2 + $0x30] sm:$0xff]
      %v419 = vld [vmem:[#allocation2 + $0x38] sm:$0xff]
      %v420 = vsel %vm400, %v412, 0.0
      %v421 = vsel %vm400, %v413, 0.0
      %v422 = vadd.f32 %v420, %v421
      %v423 = vsel %vm400, %v414, 0.0
      %v424 = vadd.f32 %v422, %v423
      %v425 = vsel %vm400, %v415, 0.0
      %v426 = vadd.f32 %v424, %v425
      %v427 = vsel %vm400, %v416, 0.0
      %v428 = vadd.f32 %v426, %v427
      %v429 = vsel %vm400, %v417, 0.0
      %v430 = vadd.f32 %v428, %v429
      %v431 = vsel %vm400, %v418, 0.0
      %v432 = vadd.f32 %v430, %v431
      %v433 = vsel %vm400, %v419, 0.0
      %v434 = vadd.f32 %v432, %v433
      %435 = vadd.xlane.f32.xlu0 %v434
      %v436 = vpop.xlane.xlu0 %435
      %v437 = vrot.slane %v436, 4
      %v438 = vadd.f32 %v436, %v437
      %v439 = vrot.slane %v438, 2
      %v440 = vadd.f32 %v438, %v439
      %v441 = vrot.slane %v440, 1
      %v442 = vadd.f32 %v440, %v441
      %s443 = vtos %v442
      %s444 = scalar_lea.smem [#allocation3], 0
      %445 = sst [smem:[%s444]] %s443
    $region17: #{tpu_custom_call.1} parent=1 // pred_fallthru
      _
    // Predicated region
    $region18: #{tpu_custom_call.1} parent=1 // pred_check
      _
    $region19: #{tpu_custom_call.1} parent=1 // pred_check_branch
      %447 = sbr.rel (0) target = $region21
    $region20: #{tpu_custom_call.1} parent=1 // pred_region
      %s449 = ssub.s32 16, 16
      %450 = vsyncadd [#allocation4], %s449
      %453 = dma.smem_to_hbm [#allocation3], 16, %s2, [#allocation4]
    $region21: #{tpu_custom_call.1} parent=1 // pred_fallthru
      _
    // Predicated region
    $region22: #{tpu_custom_call.1} parent=1 // pred_check
      _
    $region23: #{tpu_custom_call.1} parent=1 // pred_check_branch
      %455 = sbr.rel (0) target = $region25
    $region24: #{tpu_custom_call.1} parent=1 // pred_region
      %456 = dma.done [#allocation4], 16
    $region25: #{tpu_custom_call.1} parent=1 // pred_fallthru
      _
    %457 = sfence
    %458 = vsyncpa [#allocation4], 1

</llo_original>
